<compile_context>
chip_gen: v5e
topology: v5e:2x2
jax: 0.10.0
libtpu: 0.0.40
codegen_flags: <defaults>
</compile_context>

<pallas_src>
import jax
import jax.numpy as jnp
from jax.experimental import pallas as pl
from jax.experimental.pallas import tpu as pltpu


def _node_drop_kernel(mask_ref, embeds_ref, out_ref):
    # (tile_n, 1) per-node mask broadcast over the embedding (lane) dimension.
    out_ref[...] = embeds_ref[...] * mask_ref[...]


def _choose_tile_n(n, d, itemsize, target_block_bytes=4 << 20):
    """Largest sublane-aligned row tile giving ~target_block_bytes per block."""
    rows = max(1, target_block_bytes // max(1, d * itemsize))
    if rows >= n:
        return n                      # whole array in a single block
    return max(8, (rows // 8) * 8)    # keep second-minor dim 8-aligned


def node_drop(embeds, keep_rate, key=None, *, tile_n=None):
    """NodeDrop forward.

    embeds:    (N, D) float array (node embedding matrix)
    keep_rate: python float, probability a node is kept
    key:       jax PRNG key used to draw the per-node Bernoulli mask
    """
    if keep_rate == 1.0:              # static short-circuit, same as the module
        return embeds

    if key is None:
        key = jax.random.PRNGKey(0)

    n, d = embeds.shape

    # Same construction as torch: floor(U[0,1) + keep_rate) in {0., 1.}
    u = jax.random.uniform(key, (n, 1), dtype=jnp.float32)
    mask = jnp.floor(u + jnp.float32(keep_rate)).astype(embeds.dtype)

    if tile_n is None:
        tile_n = _choose_tile_n(n, d, embeds.dtype.itemsize)
    tile_n = min(tile_n, n)

    grid = (pl.cdiv(n, tile_n),)

    return pl.pallas_call(
        _node_drop_kernel,
        out_shape=jax.ShapeDtypeStruct((n, d), embeds.dtype),
        grid=grid,
        in_specs=[
            pl.BlockSpec((tile_n, 1), lambda i: (i, 0)),   # per-node mask
            pl.BlockSpec((tile_n, d), lambda i: (i, 0)),   # embeddings
        ],
        out_specs=pl.BlockSpec((tile_n, d), lambda i: (i, 0)),
        compiler_params=pltpu.CompilerParams(
            dimension_semantics=("parallel",),   # rows independent -> megacore on v7x
            vmem_limit_bytes=48 << 20,           # fits v7x's 64 MiB VMEM with headroom
        ),
    )(mask, embeds)


if __name__ == "__main__":
    # synthetic "graph": user_num = 64, item_num = 64 -> 128 nodes, dim = 32
    user_num, item_num, dim = 64, 64, 32
    node_num = user_num + item_num

    key = jax.random.PRNGKey(0)
    k_embeds, k_mask = jax.random.split(key)
    embeds = jax.random.normal(k_embeds, (node_num, dim), dtype=jnp.float32)

    keep_rate = 0.8
    out = jax.block_until_ready(node_drop(embeds, keep_rate, key=k_mask))

    # Each row must be either the original row (kept) or all zeros (dropped).
    row_kept = jnp.all(out == embeds, axis=1)
    row_dropped = jnp.all(out == 0.0, axis=1)
    assert bool(jnp.all(row_kept | row_dropped))
    assert out.shape == embeds.shape and out.dtype == embeds.dtype
    assert int(jnp.sum(row_kept)) > 0          # at keep_rate=0.8 some rows survive

    # Cross-check against the pure-JAX reference (same mask construction).
    u_ref = jax.random.uniform(k_mask, (node_num, 1), dtype=jnp.float32)
    mask_ref = jnp.floor(u_ref + jnp.float32(keep_rate)).astype(embeds.dtype)
    assert bool(jnp.all(out == embeds * mask_ref))

    # keep_rate == 1.0 identity path (static python float -> pure passthrough)
    out_id = jax.block_until_ready(node_drop(embeds, 1.0))
    assert bool(jnp.all(out_id == embeds))

    print("KERNEL_OK")
</pallas_src>

<mosaic_0001>
module attributes {stable_mosaic.version = 11 : i64} {
  func.func @_node_drop_kernel(%arg0: i32, %arg1: memref<128x1xf32, #tpu.memory_space<vmem>>, %arg2: memref<128x32xf32, #tpu.memory_space<vmem>>, %arg3: memref<128x32xf32, #tpu.memory_space<vmem>>) attributes {dimension_semantics = [#tpu.dimension_semantics<parallel>], iteration_bounds = array<i64: 1>, scalar_prefetch = 0 : i64, scratch_operands = 0 : i64, tpu.core_type = #tpu.core_type<tc>, window_params = [{transform_indices = @transform_0, window_bounds = array<i64: 128, 1>}, {transform_indices = @transform_1, window_bounds = array<i64: 128, 32>}, {transform_indices = @transform_2, window_bounds = array<i64: 128, 32>}]} {
    %c0 = arith.constant 0 : index
    %c0_0 = arith.constant 0 : index
    %0 = vector.load %arg2[%c0, %c0_0] : memref<128x32xf32, #tpu.memory_space<vmem>>, vector<128x32xf32>
    %c0_1 = arith.constant 0 : index
    %c0_2 = arith.constant 0 : index
    %1 = vector.load %arg1[%c0_1, %c0_2] : memref<128x1xf32, #tpu.memory_space<vmem>>, vector<128x1xf32>
    %2 = vector.broadcast %1 : vector<128x1xf32> to vector<128x32xf32>
    %3 = arith.mulf %0, %2 : vector<128x32xf32>
    %c0_3 = arith.constant 0 : index
    %c0_4 = arith.constant 0 : index
    %4 = vector.load %arg3[%c0_3, %c0_4] : memref<128x32xf32, #tpu.memory_space<vmem>>, vector<128x32xf32>
    tpu.vector_store %arg3[%c0_3, %c0_4], %3 {strides = array<i32>} : memref<128x32xf32, #tpu.memory_space<vmem>>, vector<128x32xf32>,
    return
  }
  func.func @transform_0(%arg0: i32) -> (i32, i32) {
    %c0_i32 = arith.constant 0 : i32
    %c0_i32_0 = arith.constant 0 : i32
    return %arg0, %c0_i32 : i32, i32
  }
  func.func @transform_1(%arg0: i32) -> (i32, i32) {
    %c0_i32 = arith.constant 0 : i32
    %c0_i32_0 = arith.constant 0 : i32
    return %arg0, %c0_i32 : i32, i32
  }
  func.func @transform_2(%arg0: i32) -> (i32, i32) {
    %c0_i32 = arith.constant 0 : i32
    %c0_i32_0 = arith.constant 0 : i32
    return %arg0, %c0_i32 : i32, i32
  }
}

</mosaic_0001>

<llo_original>
// kernel: tpu_custom_call.1
$region0: #{tpu_custom_call.1}
  #allocation0 [shape = 'u32[]', space=smem, size = 0x4, offset = 0x4, fixed_abs, tag = 'smem constant byte address 0x4 - core index']
  #allocation1 [shape = 'u32[72,128]{1,0:T(1,128)}', space=vmem, size = 0x9000, scoped, tag = 'internal scratch']
  %s0 = inlined_call_operand.vmem [shape: f32[128,1], index: 0, kind: input, shape index: {}]
  %s1 = inlined_call_operand.vmem [shape: f32[128,32], index: 1, kind: input, shape index: {}]
  %s2 = inlined_call_operand.vmem [shape: f32[128,32], index: 2, kind: output, shape index: {}]
  %s3 = sld [smem:[#allocation0]]
  $region18: #{tpu_custom_call.1} parent=0
    _
  %s5 = ssub.s32 1, %s3
  %s6 = scalar_select 0, %s5, %s3
  // Predicated region
  $region2: #{tpu_custom_call.1} parent=0 // pred_check
    _
  $region3: #{tpu_custom_call.1} parent=0 // pred_check_branch
    %8 = sbr.rel (0) target = $region5
  $region4: #{tpu_custom_call.1} parent=0 // pred_region
    _
  $region5: #{tpu_custom_call.1} parent=0 // pred_fallthru
    _
  // Predicated region
  $region6: #{tpu_custom_call.1} parent=0 // pred_check
    _
  $region7: #{tpu_custom_call.1} parent=0 // pred_check_branch
    %10 = sbr.rel (0) target = $region9
  $region8: #{tpu_custom_call.1} parent=0 // pred_region
    _
  $region9: #{tpu_custom_call.1} parent=0 // pred_fallthru
    _
  %v11 = vld [vmem:[%s1] sm:$0xff]
  %v12 = vld [vmem:[%s1 + $0x8] sm:$0xff]
  %v13 = vld [vmem:[%s1 + $0x10] sm:$0xff]
  %v14 = vld [vmem:[%s1 + $0x18] sm:$0xff]
  %v15 = vld [vmem:[%s1 + $0x20] sm:$0xff]
  %v16 = vld [vmem:[%s1 + $0x28] sm:$0xff]
  %v17 = vld [vmem:[%s1 + $0x30] sm:$0xff]
  %v18 = vld [vmem:[%s1 + $0x38] sm:$0xff]
  %v19 = vld [vmem:[%s1 + $0x40] sm:$0xff]
  %v20 = vld [vmem:[%s1 + $0x48] sm:$0xff]
  %v21 = vld [vmem:[%s1 + $0x50] sm:$0xff]
  %v22 = vld [vmem:[%s1 + $0x58] sm:$0xff]
  %v23 = vld [vmem:[%s1 + $0x60] sm:$0xff]
  %v24 = vld [vmem:[%s1 + $0x68] sm:$0xff]
  %v25 = vld [vmem:[%s1 + $0x70] sm:$0xff]
  %v26 = vld [vmem:[%s1 + $0x78] sm:$0xff]
  %v27 = vld [vmem:[%s0] sm:$0xff]
  %v28 = vld [vmem:[%s0 + $0x8] sm:$0xff]
  %v29 = vld [vmem:[%s0 + $0x10] sm:$0xff]
  %v30 = vld [vmem:[%s0 + $0x18] sm:$0xff]
  %v31 = vld [vmem:[%s0 + $0x20] sm:$0xff]
  %v32 = vld [vmem:[%s0 + $0x28] sm:$0xff]
  %v33 = vld [vmem:[%s0 + $0x30] sm:$0xff]
  %v34 = vld [vmem:[%s0 + $0x38] sm:$0xff]
  %v35 = vld [vmem:[%s0 + $0x40] sm:$0xff]
  %v36 = vld [vmem:[%s0 + $0x48] sm:$0xff]
  %v37 = vld [vmem:[%s0 + $0x50] sm:$0xff]
  %v38 = vld [vmem:[%s0 + $0x58] sm:$0xff]
  %v39 = vld [vmem:[%s0 + $0x60] sm:$0xff]
  %v40 = vld [vmem:[%s0 + $0x68] sm:$0xff]
  %v41 = vld [vmem:[%s0 + $0x70] sm:$0xff]
  %v42 = vld [vmem:[%s0 + $0x78] sm:$0xff]
  %44 = vset.pattern.permute.xlu0 0
  %45 = vperm.xlu0 %44, %v27
  %v46 = vpop.permute.xlu0 %45
  %49 = vset.pattern.permute.xlu0 0
  %50 = vperm.xlu0 %49, %v28
  %v51 = vpop.permute.xlu0 %50
  %54 = vset.pattern.permute.xlu0 0
  %55 = vperm.xlu0 %54, %v29
  %v56 = vpop.permute.xlu0 %55
  %59 = vset.pattern.permute.xlu0 0
  %60 = vperm.xlu0 %59, %v30
  %v61 = vpop.permute.xlu0 %60
  %64 = vset.pattern.permute.xlu0 0
  %65 = vperm.xlu0 %64, %v31
  %v66 = vpop.permute.xlu0 %65
  %69 = vset.pattern.permute.xlu0 0
  %70 = vperm.xlu0 %69, %v32
  %v71 = vpop.permute.xlu0 %70
  %74 = vset.pattern.permute.xlu0 0
  %75 = vperm.xlu0 %74, %v33
  %v76 = vpop.permute.xlu0 %75
  %79 = vset.pattern.permute.xlu0 0
  %80 = vperm.xlu0 %79, %v34
  %v81 = vpop.permute.xlu0 %80
  %84 = vset.pattern.permute.xlu0 0
  %85 = vperm.xlu0 %84, %v35
  %v86 = vpop.permute.xlu0 %85
  %89 = vset.pattern.permute.xlu0 0
  %90 = vperm.xlu0 %89, %v36
  %v91 = vpop.permute.xlu0 %90
  %94 = vset.pattern.permute.xlu0 0
  %95 = vperm.xlu0 %94, %v37
  %v96 = vpop.permute.xlu0 %95
  %99 = vset.pattern.permute.xlu0 0
  %100 = vperm.xlu0 %99, %v38
  %v101 = vpop.permute.xlu0 %100
  %104 = vset.pattern.permute.xlu0 0
  %105 = vperm.xlu0 %104, %v39
  %v106 = vpop.permute.xlu0 %105
  %109 = vset.pattern.permute.xlu0 0
  %110 = vperm.xlu0 %109, %v40
  %v111 = vpop.permute.xlu0 %110
  %114 = vset.pattern.permute.xlu0 0
  %115 = vperm.xlu0 %114, %v41
  %v116 = vpop.permute.xlu0 %115
  %119 = vset.pattern.permute.xlu0 0
  %120 = vperm.xlu0 %119, %v42
  %v121 = vpop.permute.xlu0 %120
  %v123 = vmul.f32 %v11, %v46
  %v124 = vmul.f32 %v12, %v51
  %v125 = vmul.f32 %v13, %v56
  %v126 = vmul.f32 %v14, %v61
  %v127 = vmul.f32 %v15, %v66
  %v128 = vmul.f32 %v16, %v71
  %v129 = vmul.f32 %v17, %v76
  %v130 = vmul.f32 %v18, %v81
  %v131 = vmul.f32 %v19, %v86
  %v132 = vmul.f32 %v20, %v91
  %v133 = vmul.f32 %v21, %v96
  %v134 = vmul.f32 %v22, %v101
  %v135 = vmul.f32 %v23, %v106
  %v136 = vmul.f32 %v24, %v111
  %v137 = vmul.f32 %v25, %v116
  %v138 = vmul.f32 %v26, %v121
  %vm139 = vcmask 261120
  %140 = vst.msk [vmem:[%s2] sm:$0xff] %vm139, %v123
  %141 = vst.msk [vmem:[%s2 + $0x8] sm:$0xff] %vm139, %v124
  %142 = vst.msk [vmem:[%s2 + $0x10] sm:$0xff] %vm139, %v125
  %143 = vst.msk [vmem:[%s2 + $0x18] sm:$0xff] %vm139, %v126
  %144 = vst.msk [vmem:[%s2 + $0x20] sm:$0xff] %vm139, %v127
  %145 = vst.msk [vmem:[%s2 + $0x28] sm:$0xff] %vm139, %v128
  %146 = vst.msk [vmem:[%s2 + $0x30] sm:$0xff] %vm139, %v129
  %147 = vst.msk [vmem:[%s2 + $0x38] sm:$0xff] %vm139, %v130
  %148 = vst.msk [vmem:[%s2 + $0x40] sm:$0xff] %vm139, %v131
  %149 = vst.msk [vmem:[%s2 + $0x48] sm:$0xff] %vm139, %v132
  %150 = vst.msk [vmem:[%s2 + $0x50] sm:$0xff] %vm139, %v133
  %151 = vst.msk [vmem:[%s2 + $0x58] sm:$0xff] %vm139, %v134
  %152 = vst.msk [vmem:[%s2 + $0x60] sm:$0xff] %vm139, %v135
  %153 = vst.msk [vmem:[%s2 + $0x68] sm:$0xff] %vm139, %v136
  %154 = vst.msk [vmem:[%s2 + $0x70] sm:$0xff] %vm139, %v137
  %155 = vst.msk [vmem:[%s2 + $0x78] sm:$0xff] %vm139, %v138
  // Predicated region
  $region10: #{tpu_custom_call.1} parent=0 // pred_check
    _
  $region11: #{tpu_custom_call.1} parent=0 // pred_check_branch
    %157 = sbr.rel (0) target = $region13
  $region12: #{tpu_custom_call.1} parent=0 // pred_region
    _
  $region13: #{tpu_custom_call.1} parent=0 // pred_fallthru
    _
  // Predicated region
  $region14: #{tpu_custom_call.1} parent=0 // pred_check
    _
  $region15: #{tpu_custom_call.1} parent=0 // pred_check_branch
    %159 = sbr.rel (0) target = $region17
  $region16: #{tpu_custom_call.1} parent=0 // pred_region
    _
  $region17: #{tpu_custom_call.1} parent=0 // pred_fallthru
    _

</llo_original>
